<compile_context>
chip_gen: v6e
topology: v6e:2x2x1
jax: 0.10.0
libtpu: 0.0.40
codegen_flags: <defaults>
</compile_context>

<pallas_src>
import jax
import jax.numpy as jnp
import numpy as np
from jax import lax
from jax.experimental import pallas as pl
from jax.experimental.pallas import tpu as pltpu

B, F, MID, W, K = 2, 8, 16, 16, 3          # batch, feature_num, mid_channel, window_size, kernel_size
PAD = K // 2
BW = B * W
F3, M3 = 3 * F, 3 * MID                    # fused (spa|pha|amp) channel counts
_PI = float(np.pi)


def _atan2(y, x):
    """Polynomial atan2 (max err ~1e-5 rad) from guaranteed VPU ops; signs from the sign bit."""
    y_neg = pltpu.bitcast(y, jnp.int32) < 0          # true for -0.0 too (matches jnp.angle)
    x_neg = pltpu.bitcast(x, jnp.int32) < 0
    ax = jnp.abs(x)
    ay = jnp.abs(y)
    hi = jnp.maximum(ax, ay)
    lo = jnp.minimum(ax, ay)
    t = lo / jnp.maximum(hi, 1e-30)
    s = t * t
    # Abramowitz & Stegun style minimax polynomial for atan on [0, 1]
    p = 0.0208351
    p = p * s - 0.0851330
    p = p * s + 0.1801410
    p = p * s - 0.3302995
    p = p * s + 0.9998660
    r = p * t
    r = jnp.where(ay > ax, 0.5 * _PI - r, r)
    r = jnp.where(x_neg, _PI - r, r)
    return jnp.where(y_neg, -r, r)


def sff_kernel(data_ref, w_ref, b_ref, idft_ref, mask_ref, out_ref):
    x2 = data_ref[0:F, :]
    f_re = data_ref[F:2 * F, :]
    f_im = data_ref[2 * F:3 * F, :]

    # angle / abs of the forward FFT, fused in-kernel
    mag = jnp.sqrt(f_re * f_re + f_im * f_im)
    pha = _atan2(f_im, f_re)

    def taps(u, cin):
        # Stack the K=3 conv taps on sublanes: tap j is u shifted by (j - PAD) lanes via an XLU
        # rotate; the precomputed mask zeroes lanes that wrapped across a batch boundary.
        t0 = pltpu.roll(u, shift=(PAD - 0) % BW, axis=1) * mask_ref[0, :cin, :]
        t2 = pltpu.roll(u, shift=(PAD - 2) % BW, axis=1) * mask_ref[2, :cin, :]
        return jnp.concatenate([t0, u, t2], axis=0)          # (K*cin, BW)

    # layer 1: all three branches (spa / phase / magnitude) in one block-diagonal matmul
    u1 = jnp.concatenate([x2, pha, mag], axis=0)             # (3F, BW)
    w1 = w_ref[0, :, :K * F3]                                # (3*MID, K*3F)
    h = jnp.maximum(
        jnp.dot(w1, taps(u1, F3), preferred_element_type=jnp.float32) + b_ref[0], 0.0)

    # layer 2: (3F, K*3*MID) @ (K*3*MID, BW)
    w2 = w_ref[1, :F3, :]
    o = jnp.dot(w2, taps(h, M3), preferred_element_type=jnp.float32) + b_ref[1, :F3]
    spa = o[0:F, :]
    pha_r = o[F:2 * F, :]
    amp_r = o[2 * F:3 * F, :]

    # inverse DFT for all batches at once via block-diagonal (BW, BW) cos/sin matrices
    re_r = amp_r * jnp.cos(pha_r)
    im_r = amp_r * jnp.sin(pha_r)
    icos = idft_ref[0]                                       # include 1/W (norm='backward')
    isin = idft_ref[1]
    y_re = (jnp.dot(re_r, icos, preferred_element_type=jnp.float32)
            - jnp.dot(im_r, isin, preferred_element_type=jnp.float32))
    y_im = (jnp.dot(re_r, isin, preferred_element_type=jnp.float32)
            + jnp.dot(im_r, icos, preferred_element_type=jnp.float32))
    fre = jnp.sqrt(y_re * y_re + y_im * y_im)

    # fb=False, sf=True, ff=True -> feature = Spa + Fre; output = feature + x.  One dense store.
    out_ref[...] = spa + fre + x2


def build_constants():
    # Block-diagonal inverse-DFT pair (norm='backward' => 1/W), covering all batches at once.
    k = np.arange(W)[:, None]
    n = np.arange(W)[None, :]
    ang = 2.0 * np.pi * k * n / W
    icos = np.kron(np.eye(B), np.cos(ang) / W)               # (BW, BW)
    isin = np.kron(np.eye(B), np.sin(ang) / W)
    idft = np.stack([icos, isin]).astype(np.float32)         # (2, BW, BW)
    # Per-tap validity mask over the flattened (batch, time) lane axis, pre-broadcast to the
    # tallest sublane height used (layer-1 slices the first 3F rows).
    t = np.arange(BW) % W
    mask = np.stack([((t + j - PAD >= 0) & (t + j - PAD < W)).astype(np.float32)
                     for j in range(K)])                     # (K, BW)
    mask = np.ascontiguousarray(np.broadcast_to(mask[:, None, :], (K, M3, BW)))
    return jnp.asarray(idft), jnp.asarray(mask)


def pack_sff_params(params):
    """Fuse the 3 branches x K taps of each conv layer into one block-diagonal weight/bias."""
    w1 = np.zeros((M3, K * F3), np.float32)                  # (48, 72)
    w2 = np.zeros((F3, K * M3), np.float32)                  # (24, 144)
    b1 = np.zeros((M3, 1), np.float32)
    b2 = np.zeros((F3, 1), np.float32)
    layer1 = ("ws1", "wp1", "wa1")                           # (MID, F, K)
    layer2 = ("ws2", "wp2", "wa2")                           # (F, MID, K)
    for br in range(3):
        wa = np.asarray(params[layer1[br]])
        wb = np.asarray(params[layer2[br]])
        b1[br * MID:(br + 1) * MID, 0] = np.asarray(params[layer1[br].replace("w", "b")])
        b2[br * F:(br + 1) * F, 0] = np.asarray(params[layer2[br].replace("w", "b")])
        for j in range(K):
            w1[br * MID:(br + 1) * MID, j * F3 + br * F: j * F3 + (br + 1) * F] = wa[:, :, j]
            w2[br * F:(br + 1) * F, j * M3 + br * MID: j * M3 + (br + 1) * MID] = wb[:, :, j]
    wpack = np.zeros((2, M3, K * M3), np.float32)            # one weight slab  (2, 48, 144)
    wpack[0, :, :K * F3] = w1
    wpack[1, :F3, :] = w2
    bpack = np.zeros((2, M3, 1), np.float32)                 # one bias slab    (2, 48, 1)
    bpack[0] = b1
    bpack[1, :F3] = b2
    return jnp.asarray(wpack), jnp.asarray(bpack)


def init_params(key):
    shapes = {
        "ws1": (MID, F, K), "ws2": (F, MID, K),
        "wp1": (MID, F, K), "wp2": (F, MID, K),
        "wa1": (MID, F, K), "wa2": (F, MID, K),
    }
    params = {}
    for name, shp in shapes.items():
        key, k1, k2 = jax.random.split(key, 3)
        params[name] = 0.2 * jax.random.normal(k1, shp, jnp.float32)
        params[name.replace("w", "b")] = 0.1 * jax.random.normal(k2, (shp[0],), jnp.float32)
    return params


@jax.jit
def sff_block_pallas(x, wpack, bpack, idft, mask):
    # TODO(synk): forward FFT stays in XLA (see header); its angle/abs and everything downstream
    # (6 convs, complex reconstruction, iFFT, |.|, residual) run in the single pallas_call below.
    xt = jnp.transpose(x, (1, 0, 2))                                   # (F, B, W)
    freq = jnp.fft.fft(xt, axis=-1)                                    # norm='backward' (default)
    data = jnp.concatenate([xt, jnp.real(freq), jnp.imag(freq)],
                           axis=0).reshape(3 * F, BW).astype(jnp.float32)  # (3F, B*W)

    vmem = pl.BlockSpec(memory_space=pltpu.MemorySpace.VMEM)
    out2 = pl.pallas_call(
        sff_kernel,
        out_shape=jax.ShapeDtypeStruct((F, BW), jnp.float32),
        in_specs=[vmem] * 5,
        out_specs=vmem,
    )(data, wpack, bpack, idft, mask)
    return jnp.transpose(out2.reshape(F, B, W), (1, 0, 2))             # (B, F, W)


# ------------------------- pure-JAX reference for verification -------------------------
def _conv1d_ref(x, w, b):
    y = lax.conv_general_dilated(x, w, (1,), [(PAD, PAD)],
                                 dimension_numbers=("NCH", "OIH", "NCH"))
    return y + b[None, :, None]


def sff_block_ref(x, p):
    relu = lambda a: jnp.maximum(a, 0.0)
    freq = jnp.fft.fft(x, axis=2)
    ph = jnp.angle(freq)
    mg = jnp.abs(freq)
    spa = _conv1d_ref(relu(_conv1d_ref(x, p["ws1"], p["bs1"])), p["ws2"], p["bs2"])
    pha = _conv1d_ref(relu(_conv1d_ref(ph, p["wp1"], p["bp1"])), p["wp2"], p["bp2"])
    amp = _conv1d_ref(relu(_conv1d_ref(mg, p["wa1"], p["ba1"])), p["wa2"], p["ba2"])
    comp = amp * jnp.cos(pha) + 1j * (amp * jnp.sin(pha))
    fre = jnp.abs(jnp.fft.ifft(comp, axis=2))
    return spa + fre + x


if __name__ == "__main__":
    key = jax.random.PRNGKey(0)
    kx, kp = jax.random.split(key)
    x = jax.random.normal(kx, (B, F, W), jnp.float32)
    params = init_params(kp)

    wpack, bpack = pack_sff_params(params)     # one-time packing, outside the hot path
    idft, mask = build_constants()

    out = jax.block_until_ready(sff_block_pallas(x, wpack, bpack, idft, mask))
    ref = jax.block_until_ready(sff_block_ref(x, params))

    assert out.shape == (B, F, W)
    err = float(jnp.max(jnp.abs(out - ref)))
    assert err < 5e-2, f"max abs err {err}"
    print("KERNEL_OK")
</pallas_src>

<mosaic_0001>
module attributes {stable_mosaic.version = 11 : i64} {
  func.func @sff_kernel(%arg0: memref<24x32xf32, #tpu.memory_space<vmem>>, %arg1: memref<2x48x144xf32, #tpu.memory_space<vmem>>, %arg2: memref<2x48x1xf32, #tpu.memory_space<vmem>>, %arg3: memref<2x32x32xf32, #tpu.memory_space<vmem>>, %arg4: memref<3x48x32xf32, #tpu.memory_space<vmem>>, %arg5: memref<8x32xf32, #tpu.memory_space<vmem>>) attributes {dimension_semantics = [], scalar_prefetch = 0 : i64, scratch_operands = 0 : i64, tpu.core_type = #tpu.core_type<tc>} {
    %c0 = arith.constant 0 : index
    %c0_0 = arith.constant 0 : index
    %0 = vector.load %arg0[%c0, %c0_0] : memref<24x32xf32, #tpu.memory_space<vmem>>, vector<8x32xf32>
    %c8 = arith.constant 8 : index
    %c0_1 = arith.constant 0 : index
    %1 = vector.load %arg0[%c8, %c0_1] : memref<24x32xf32, #tpu.memory_space<vmem>>, vector<8x32xf32>
    %c16 = arith.constant 16 : index
    %c0_2 = arith.constant 0 : index
    %2 = vector.load %arg0[%c16, %c0_2] : memref<24x32xf32, #tpu.memory_space<vmem>>, vector<8x32xf32>
    %3 = arith.mulf %1, %1 : vector<8x32xf32>
    %4 = arith.mulf %2, %2 : vector<8x32xf32>
    %5 = arith.addf %3, %4 : vector<8x32xf32>
    %6 = math.sqrt %5 : vector<8x32xf32>
    %7 = tpu.bitcast %2 : vector<8x32xf32> -> vector<8x32xi32>
    %c0_i32 = arith.constant 0 : i32
    %8 = vector.broadcast %c0_i32 : i32 to vector<8x32xi32>
    %9 = arith.cmpi slt, %7, %8 : vector<8x32xi32>
    %10 = tpu.bitcast %1 : vector<8x32xf32> -> vector<8x32xi32>
    %c0_i32_3 = arith.constant 0 : i32
    %11 = vector.broadcast %c0_i32_3 : i32 to vector<8x32xi32>
    %12 = arith.cmpi slt, %10, %11 : vector<8x32xi32>
    %13 = math.absf %1 : vector<8x32xf32>
    %14 = math.absf %2 : vector<8x32xf32>
    %15 = arith.maximumf %13, %14 : vector<8x32xf32>
    %16 = arith.minimumf %13, %14 : vector<8x32xf32>
    %cst = arith.constant 1.000000e-30 : f32
    %17 = vector.broadcast %cst : f32 to vector<8x32xf32>
    %18 = arith.maximumf %15, %17 : vector<8x32xf32>
    %19 = arith.divf %16, %18 : vector<8x32xf32>
    %20 = arith.mulf %19, %19 : vector<8x32xf32>
    %cst_4 = arith.constant 2.083510e-02 : f32
    %21 = vector.broadcast %cst_4 : f32 to vector<8x32xf32>
    %22 = arith.mulf %21, %20 : vector<8x32xf32>
    %cst_5 = arith.constant 8.513300e-02 : f32
    %23 = vector.broadcast %cst_5 : f32 to vector<8x32xf32>
    %24 = arith.subf %22, %23 : vector<8x32xf32>
    %25 = arith.mulf %24, %20 : vector<8x32xf32>
    %cst_6 = arith.constant 1.801410e-01 : f32
    %26 = vector.broadcast %cst_6 : f32 to vector<8x32xf32>
    %27 = arith.addf %25, %26 : vector<8x32xf32>
    %28 = arith.mulf %27, %20 : vector<8x32xf32>
    %cst_7 = arith.constant 0.330299497 : f32
    %29 = vector.broadcast %cst_7 : f32 to vector<8x32xf32>
    %30 = arith.subf %28, %29 : vector<8x32xf32>
    %31 = arith.mulf %30, %20 : vector<8x32xf32>
    %cst_8 = arith.constant 9.998660e-01 : f32
    %32 = vector.broadcast %cst_8 : f32 to vector<8x32xf32>
    %33 = arith.addf %31, %32 : vector<8x32xf32>
    %34 = arith.mulf %33, %19 : vector<8x32xf32>
    %35 = arith.cmpf ogt, %14, %13 : vector<8x32xf32>
    %cst_9 = arith.constant 1.57079637 : f32
    %36 = vector.broadcast %cst_9 : f32 to vector<8x32xf32>
    %37 = arith.subf %36, %34 : vector<8x32xf32>
    %38 = arith.select %35, %37, %34 : vector<8x32xi1>, vector<8x32xf32>
    %cst_10 = arith.constant 3.14159274 : f32
    %39 = vector.broadcast %cst_10 : f32 to vector<8x32xf32>
    %40 = arith.subf %39, %38 : vector<8x32xf32>
    %41 = arith.select %12, %40, %38 : vector<8x32xi1>, vector<8x32xf32>
    %cst_11 = arith.constant 0.000000e+00 : f32
    %42 = vector.broadcast %cst_11 : f32 to vector<8x32xf32>
    %43 = arith.subf %42, %41 : vector<8x32xf32>
    %44 = arith.select %9, %43, %41 : vector<8x32xi1>, vector<8x32xf32>
    %45 = tpu.concatenate %0, %44, %6 in 0 : vector<8x32xf32>, vector<8x32xf32>, vector<8x32xf32> -> vector<24x32xf32>
    %c0_12 = arith.constant 0 : index
    %c0_13 = arith.constant 0 : index
    %c0_14 = arith.constant 0 : index
    %46 = vector.load %arg1[%c0_12, %c0_13, %c0_14] : memref<2x48x144xf32, #tpu.memory_space<vmem>>, vector<1x48x72xf32>
    %47 = vector.shape_cast %46 : vector<1x48x72xf32> to vector<48x72xf32>
    %c1_i32 = arith.constant 1 : i32
    %48 = tpu.dynamic_rotate %45 by %c1_i32 dim 1 : vector<24x32xf32>, i32 -> vector<24x32xf32>
    %c0_15 = arith.constant 0 : index
    %c0_16 = arith.constant 0 : index
    %c0_17 = arith.constant 0 : index
    %49 = vector.load %arg4[%c0_15, %c0_16, %c0_17] : memref<3x48x32xf32, #tpu.memory_space<vmem>>, vector<1x24x32xf32>
    %50 = vector.shape_cast %49 : vector<1x24x32xf32> to vector<24x32xf32>
    %51 = arith.mulf %48, %50 : vector<24x32xf32>
    %c31_i32 = arith.constant 31 : i32
    %52 = tpu.dynamic_rotate %45 by %c31_i32 dim 1 : vector<24x32xf32>, i32 -> vector<24x32xf32>
    %c2 = arith.constant 2 : index
    %c0_18 = arith.constant 0 : index
    %c0_19 = arith.constant 0 : index
    %53 = vector.load %arg4[%c2, %c0_18, %c0_19] : memref<3x48x32xf32, #tpu.memory_space<vmem>>, vector<1x24x32xf32>
    %54 = vector.shape_cast %53 : vector<1x24x32xf32> to vector<24x32xf32>
    %55 = arith.mulf %52, %54 : vector<24x32xf32>
    %56 = tpu.concatenate %51, %45, %55 in 0 : vector<24x32xf32>, vector<24x32xf32>, vector<24x32xf32> -> vector<72x32xf32>
    %cst_20 = arith.constant dense<0.000000e+00> : vector<48x32xf32>
    %57 = tpu.matmul %47, %56, %cst_20 {dimension_numbers = #tpu.dot_dimension_numbers<[1], [0], [0], [1], [0, 0, 1, 1], [], []>} : vector<48x72xf32>, vector<72x32xf32>, vector<48x32xf32> -> vector<48x32xf32>
    %c0_21 = arith.constant 0 : index
    %c0_22 = arith.constant 0 : index
    %c0_23 = arith.constant 0 : index
    %58 = vector.load %arg2[%c0_21, %c0_22, %c0_23] : memref<2x48x1xf32, #tpu.memory_space<vmem>>, vector<1x48x1xf32>
    %59 = vector.shape_cast %58 : vector<1x48x1xf32> to vector<48x1xf32>
    %60 = vector.broadcast %59 : vector<48x1xf32> to vector<48x32xf32>
    %61 = arith.addf %57, %60 : vector<48x32xf32>
    %cst_24 = arith.constant 0.000000e+00 : f32
    %62 = vector.broadcast %cst_24 : f32 to vector<48x32xf32>
    %63 = arith.maximumf %61, %62 : vector<48x32xf32>
    %c1 = arith.constant 1 : index
    %c0_25 = arith.constant 0 : index
    %c0_26 = arith.constant 0 : index
    %64 = vector.load %arg1[%c1, %c0_25, %c0_26] : memref<2x48x144xf32, #tpu.memory_space<vmem>>, vector<1x24x144xf32>
    %65 = vector.shape_cast %64 : vector<1x24x144xf32> to vector<24x144xf32>
    %c1_i32_27 = arith.constant 1 : i32
    %66 = tpu.dynamic_rotate %63 by %c1_i32_27 dim 1 : vector<48x32xf32>, i32 -> vector<48x32xf32>
    %c0_28 = arith.constant 0 : index
    %c0_29 = arith.constant 0 : index
    %c0_30 = arith.constant 0 : index
    %67 = vector.load %arg4[%c0_28, %c0_29, %c0_30] : memref<3x48x32xf32, #tpu.memory_space<vmem>>, vector<1x48x32xf32>
    %68 = vector.shape_cast %67 : vector<1x48x32xf32> to vector<48x32xf32>
    %69 = arith.mulf %66, %68 : vector<48x32xf32>
    %c31_i32_31 = arith.constant 31 : i32
    %70 = tpu.dynamic_rotate %63 by %c31_i32_31 dim 1 : vector<48x32xf32>, i32 -> vector<48x32xf32>
    %c2_32 = arith.constant 2 : index
    %c0_33 = arith.constant 0 : index
    %c0_34 = arith.constant 0 : index
    %71 = vector.load %arg4[%c2_32, %c0_33, %c0_34] : memref<3x48x32xf32, #tpu.memory_space<vmem>>, vector<1x48x32xf32>
    %72 = vector.shape_cast %71 : vector<1x48x32xf32> to vector<48x32xf32>
    %73 = arith.mulf %70, %72 : vector<48x32xf32>
    %74 = tpu.concatenate %69, %63, %73 in 0 : vector<48x32xf32>, vector<48x32xf32>, vector<48x32xf32> -> vector<144x32xf32>
    %cst_35 = arith.constant dense<0.000000e+00> : vector<24x32xf32>
    %75 = tpu.matmul %65, %74, %cst_35 {dimension_numbers = #tpu.dot_dimension_numbers<[1], [0], [0], [1], [0, 0, 1, 1], [], []>} : vector<24x144xf32>, vector<144x32xf32>, vector<24x32xf32> -> vector<24x32xf32>
    %c1_36 = arith.constant 1 : index
    %c0_37 = arith.constant 0 : index
    %c0_38 = arith.constant 0 : index
    %76 = vector.load %arg2[%c1_36, %c0_37, %c0_38] : memref<2x48x1xf32, #tpu.memory_space<vmem>>, vector<1x24x1xf32>
    %77 = vector.shape_cast %76 : vector<1x24x1xf32> to vector<24x1xf32>
    %78 = vector.broadcast %77 : vector<24x1xf32> to vector<24x32xf32>
    %79 = arith.addf %75, %78 : vector<24x32xf32>
    %80 = vector.extract_strided_slice %79 {offsets = [0, 0], sizes = [8, 32], strides = [1, 1]} : vector<24x32xf32> to vector<8x32xf32>
    %81 = vector.extract_strided_slice %79 {offsets = [8, 0], sizes = [8, 32], strides = [1, 1]} : vector<24x32xf32> to vector<8x32xf32>
    %82 = vector.extract_strided_slice %79 {offsets = [16, 0], sizes = [8, 32], strides = [1, 1]} : vector<24x32xf32> to vector<8x32xf32>
    %83 = math.cos %81 : vector<8x32xf32>
    %84 = arith.mulf %82, %83 : vector<8x32xf32>
    %85 = math.sin %81 : vector<8x32xf32>
    %86 = arith.mulf %82, %85 : vector<8x32xf32>
    %c0_39 = arith.constant 0 : index
    %c0_40 = arith.constant 0 : index
    %c0_41 = arith.constant 0 : index
    %87 = vector.load %arg3[%c0_39, %c0_40, %c0_41] : memref<2x32x32xf32, #tpu.memory_space<vmem>>, vector<1x32x32xf32>
    %88 = vector.shape_cast %87 : vector<1x32x32xf32> to vector<32x32xf32>
    %c1_42 = arith.constant 1 : index
    %c0_43 = arith.constant 0 : index
    %c0_44 = arith.constant 0 : index
    %89 = vector.load %arg3[%c1_42, %c0_43, %c0_44] : memref<2x32x32xf32, #tpu.memory_space<vmem>>, vector<1x32x32xf32>
    %90 = vector.shape_cast %89 : vector<1x32x32xf32> to vector<32x32xf32>
    %cst_45 = arith.constant dense<0.000000e+00> : vector<8x32xf32>
    %91 = tpu.matmul %84, %88, %cst_45 {dimension_numbers = #tpu.dot_dimension_numbers<[1], [0], [0], [1], [0, 0, 1, 1], [], []>} : vector<8x32xf32>, vector<32x32xf32>, vector<8x32xf32> -> vector<8x32xf32>
    %cst_46 = arith.constant dense<0.000000e+00> : vector<8x32xf32>
    %92 = tpu.matmul %86, %90, %cst_46 {dimension_numbers = #tpu.dot_dimension_numbers<[1], [0], [0], [1], [0, 0, 1, 1], [], []>} : vector<8x32xf32>, vector<32x32xf32>, vector<8x32xf32> -> vector<8x32xf32>
    %93 = arith.subf %91, %92 : vector<8x32xf32>
    %cst_47 = arith.constant dense<0.000000e+00> : vector<8x32xf32>
    %94 = tpu.matmul %84, %90, %cst_47 {dimension_numbers = #tpu.dot_dimension_numbers<[1], [0], [0], [1], [0, 0, 1, 1], [], []>} : vector<8x32xf32>, vector<32x32xf32>, vector<8x32xf32> -> vector<8x32xf32>
    %cst_48 = arith.constant dense<0.000000e+00> : vector<8x32xf32>
    %95 = tpu.matmul %86, %88, %cst_48 {dimension_numbers = #tpu.dot_dimension_numbers<[1], [0], [0], [1], [0, 0, 1, 1], [], []>} : vector<8x32xf32>, vector<32x32xf32>, vector<8x32xf32> -> vector<8x32xf32>
    %96 = arith.addf %94, %95 : vector<8x32xf32>
    %97 = arith.mulf %93, %93 : vector<8x32xf32>
    %98 = arith.mulf %96, %96 : vector<8x32xf32>
    %99 = arith.addf %97, %98 : vector<8x32xf32>
    %100 = math.sqrt %99 : vector<8x32xf32>
    %101 = arith.addf %80, %100 : vector<8x32xf32>
    %102 = arith.addf %101, %0 : vector<8x32xf32>
    %c0_49 = arith.constant 0 : index
    %c0_50 = arith.constant 0 : index
    %103 = vector.load %arg5[%c0_49, %c0_50] : memref<8x32xf32, #tpu.memory_space<vmem>>, vector<8x32xf32>
    tpu.vector_store %arg5[%c0_49, %c0_50], %102 {strides = array<i32>} : memref<8x32xf32, #tpu.memory_space<vmem>>, vector<8x32xf32>,
    return
  }
}

</mosaic_0001>

<llo_original>
// kernel: sff_block_pallas.1
$region0: #{sff_block_pallas.1}
  #allocation0 [shape = 'u32[]', space=smem, size = 0x4, offset = 0x4, fixed_abs, tag = 'smem constant byte address 0x4 - core index']
  #allocation1 [shape = 'u32[144,128]{1,0:T(1,128)}', space=vmem, size = 0x12000, scoped, tag = 'internal scratch']
  %s0 = inlined_call_operand.vmem [shape: f32[24,32], index: 0, kind: input, shape index: {}]
  %s1 = inlined_call_operand.vmem [shape: f32[2,48,144], index: 1, kind: input, shape index: {}]
  %s2 = inlined_call_operand.vmem [shape: f32[2,48,1], index: 2, kind: input, shape index: {}]
  %s3 = inlined_call_operand.vmem [shape: f32[2,32,32], index: 3, kind: input, shape index: {}]
  %s4 = inlined_call_operand.vmem [shape: f32[3,48,32], index: 4, kind: input, shape index: {}]
  %s5 = inlined_call_operand.vmem [shape: f32[8,32], index: 5, kind: output, shape index: {}]
  %s6 = sld [smem:[#allocation0]]
  $region30: #{sff_block_pallas.1} parent=0
    _
  %s8 = ssub.s32 1, %s6
  %s9 = scalar_select 0, %s8, %s6
  // Predicated region
  $region2: #{sff_block_pallas.1} parent=0 // pred_check
    _
  $region3: #{sff_block_pallas.1} parent=0 // pred_check_branch
    %11 = sbr.rel (0) target = $region5
  $region4: #{sff_block_pallas.1} parent=0 // pred_region
    _
  $region5: #{sff_block_pallas.1} parent=0 // pred_fallthru
    _
  // Predicated region
  $region6: #{sff_block_pallas.1} parent=0 // pred_check
    _
  $region7: #{sff_block_pallas.1} parent=0 // pred_check_branch
    %13 = sbr.rel (0) target = $region9
  $region8: #{sff_block_pallas.1} parent=0 // pred_region
    _
  $region9: #{sff_block_pallas.1} parent=0 // pred_fallthru
    _
  // Predicated region
  $region10: #{sff_block_pallas.1} parent=0 // pred_check
    _
  $region11: #{sff_block_pallas.1} parent=0 // pred_check_branch
    %15 = sbr.rel (0) target = $region13
  $region12: #{sff_block_pallas.1} parent=0 // pred_region
    _
  $region13: #{sff_block_pallas.1} parent=0 // pred_fallthru
    _
  // Predicated region
  $region14: #{sff_block_pallas.1} parent=0 // pred_check
    _
  $region15: #{sff_block_pallas.1} parent=0 // pred_check_branch
    %17 = sbr.rel (0) target = $region17
  $region16: #{sff_block_pallas.1} parent=0 // pred_region
    _
  $region17: #{sff_block_pallas.1} parent=0 // pred_fallthru
    _
  // Predicated region
  $region18: #{sff_block_pallas.1} parent=0 // pred_check
    _
  $region19: #{sff_block_pallas.1} parent=0 // pred_check_branch
    %19 = sbr.rel (0) target = $region21
  $region20: #{sff_block_pallas.1} parent=0 // pred_region
    _
  $region21: #{sff_block_pallas.1} parent=0 // pred_fallthru
    _
  %v20 = vld [vmem:[%s0] sm:$0xff]
  %v21 = vld [vmem:[%s0 + $0x8] sm:$0xff]
  %v22 = vld [vmem:[%s0 + $0x10] sm:$0xff]
  %v23 = vmul.f32 %v21, %v21
  %v24 = vmul.f32 %v22, %v22
  %v25 = vadd.f32 %v23, %v24
  %v26 = vrsqrt.pop %v25
  %v27 = vmul.f32 %v25, %v26
  %vm28 = vcmp.eq.f32.partialorder %v25, inf
  %v29 = vsel %vm28, %v25, %v27
  %vm30 = vcmp.eq.f32.partialorder %v25, 0.0
  %v31 = vand.u32 %v25, 2147483648
  %v32 = vsel %vm30, %v31, %v29
  %vm34 = vcmp.lt.s32.totalorder %v22, 0
  %vm36 = vcmp.lt.s32.totalorder %v21, 0
  %v37 = vand.u32 2147483647, %v21
  %v38 = vand.u32 2147483647, %v22
  %v39 = vmax.f32 %v37, %v38
  %v40 = vmin.f32 %v37, %v38
  %v41 = vmax.f32 %v39, 1e-30
  %v42 = vrcp.pop %v41
  %v43 = vmul.f32 %v40, %v42
  %v44 = vmul.f32 %v43, %v43
  %v45 = vmul.f32 %v44, 0.0208351
  %v46 = vsub.f32 %v45, 0.085133
  %v47 = vmul.f32 %v46, %v44
  %v48 = vadd.f32 %v47, 0.180141
  %v49 = vmul.f32 %v48, %v44
  %v50 = vsub.f32 %v49, 0.3302995
  %v51 = vmul.f32 %v50, %v44
  %v52 = vadd.f32 %v51, 0.999866
  %v53 = vmul.f32 %v52, %v43
  %vm54 = vcmp.gt.f32.partialorder %v38, %v37
  %v55 = vsub.f32 1.5707964, %v53
  %v56 = vsel %vm54, %v55, %v53
  %v57 = vsub.f32 3.1415927, %v56
  %v58 = vsel %vm36, %v57, %v56
  %v59 = vsub.f32 0.0, %v58
  %v60 = vsel %vm34, %v59, %v58
  %v61 = vld [vmem:[%s1] sm:$0xff]
  %v62 = vld [vmem:[%s1 + $0x10] sm:$0xff]
  %v63 = vld [vmem:[%s1 + $0x20] sm:$0xff]
  %v64 = vld [vmem:[%s1 + $0x30] sm:$0xff]
  %v65 = vld [vmem:[%s1 + $0x40] sm:$0xff]
  %v66 = vld [vmem:[%s1 + $0x50] sm:$0xff]
  %vm67 = vcmask 1047808
  %68 = vrot.lane.b32.xlu0 %v20, 32
  %v69 = vpop.permute.xlu0 %68
  %v70 = vsel %vm67, %v69, %v20
  %71 = vrot.lane.b32.xlu0 %v60, 32
  %v72 = vpop.permute.xlu0 %71
  %v73 = vsel %vm67, %v72, %v60
  %74 = vrot.lane.b32.xlu0 %v32, 32
  %v75 = vpop.permute.xlu0 %74
  %v76 = vsel %vm67, %v75, %v32
  %77 = vrot.lane.b32.xlu0 %v70, 32
  %v78 = vpop.permute.xlu0 %77
  %79 = vrot.lane.b32.xlu0 %v73, 32
  %v80 = vpop.permute.xlu0 %79
  %81 = vrot.lane.b32.xlu0 %v76, 32
  %v82 = vpop.permute.xlu0 %81
  %v83 = vsel %vm67, %v78, %v20
  %v84 = vsel %vm67, %v80, %v60
  %v85 = vsel %vm67, %v82, %v32
  %v86 = vld [vmem:[%s4] sm:$0xff]
  %v87 = vld [vmem:[%s4 + $0x8] sm:$0xff]
  %v88 = vld [vmem:[%s4 + $0x10] sm:$0xff]
  %92 = vrot.lane.b32.xlu0 %v86, 31
  %v93 = vpop.permute.xlu0 %92
  %94 = vrot.lane.b32.xlu0 %v87, 31
  %v95 = vpop.permute.xlu0 %94
  %96 = vrot.lane.b32.xlu0 %v88, 31
  %v97 = vpop.permute.xlu0 %96
  %v101 = vmul.f32 %v83, %v93
  %v102 = vmul.f32 %v84, %v95
  %v103 = vmul.f32 %v85, %v97
  %s104 = scalar_lea.vmem %s4, 96
  %v105 = vld [vmem:[%s104] sm:$0xff]
  %v106 = vld [vmem:[%s104 + $0x8] sm:$0xff]
  %v107 = vld [vmem:[%s104 + $0x10] sm:$0xff]
  %111 = vrot.lane.b32.xlu0 %v105, 1
  %v112 = vpop.permute.xlu0 %111
  %113 = vrot.lane.b32.xlu0 %v106, 1
  %v114 = vpop.permute.xlu0 %113
  %115 = vrot.lane.b32.xlu0 %v107, 1
  %v116 = vpop.permute.xlu0 %115
  %v120 = vmul.f32 %v83, %v112
  %v121 = vmul.f32 %v84, %v114
  %v122 = vmul.f32 %v85, %v116
  %126 = vrot.lane.b32.xlu0 %v20, 31
  %v127 = vpop.permute.xlu0 %126
  %128 = vrot.lane.b32.xlu0 %v60, 31
  %v129 = vpop.permute.xlu0 %128
  %130 = vrot.lane.b32.xlu0 %v32, 31
  %v131 = vpop.permute.xlu0 %130
  %135 = vrot.lane.b32.xlu0 %v120, 30
  %v136 = vpop.permute.xlu0 %135
  %137 = vrot.lane.b32.xlu0 %v121, 30
  %v138 = vpop.permute.xlu0 %137
  %139 = vrot.lane.b32.xlu0 %v122, 30
  %v140 = vpop.permute.xlu0 %139
  %v141 = vld [vmem:[%s2] sm:$0xff]
  %v142 = vld [vmem:[%s2 + $0x8] sm:$0xff]
  %v143 = vld [vmem:[%s2 + $0x10] sm:$0xff]
  %v144 = vld [vmem:[%s2 + $0x18] sm:$0xff]
  %v145 = vld [vmem:[%s2 + $0x20] sm:$0xff]
  %v146 = vld [vmem:[%s2 + $0x28] sm:$0xff]
  %148 = vset.pattern.permute.xlu0 0
  %149 = vperm.xlu0 %148, %v141
  %v150 = vpop.permute.xlu0 %149
  %153 = vset.pattern.permute.xlu0 0
  %154 = vperm.xlu0 %153, %v142
  %v155 = vpop.permute.xlu0 %154
  %158 = vset.pattern.permute.xlu0 0
  %159 = vperm.xlu0 %158, %v143
  %v160 = vpop.permute.xlu0 %159
  %163 = vset.pattern.permute.xlu0 0
  %164 = vperm.xlu0 %163, %v144
  %v165 = vpop.permute.xlu0 %164
  %168 = vset.pattern.permute.xlu0 0
  %169 = vperm.xlu0 %168, %v145
  %v170 = vpop.permute.xlu0 %169
  %173 = vset.pattern.permute.xlu0 0
  %174 = vperm.xlu0 %173, %v146
  %v175 = vpop.permute.xlu0 %174
  %180 = vrot.lane.b32.xlu0 %v101, 97
  %v181 = vpop.permute.xlu0 %180
  %182 = vrot.lane.b32.xlu0 %v102, 97
  %v183 = vpop.permute.xlu0 %182
  %184 = vrot.lane.b32.xlu0 %v103, 97
  %v185 = vpop.permute.xlu0 %184
  %186 = vrot.lane.b32.xlu0 %v127, 97
  %v187 = vpop.permute.xlu0 %186
  %188 = vrot.lane.b32.xlu0 %v129, 97
  %v189 = vpop.permute.xlu0 %188
  %190 = vrot.lane.b32.xlu0 %v131, 97
  %v191 = vpop.permute.xlu0 %190
  %192 = vrot.lane.b32.xlu0 %v136, 97
  %v193 = vpop.permute.xlu0 %192
  %194 = vrot.lane.b32.xlu0 %v138, 97
  %v195 = vpop.permute.xlu0 %194
  %196 = vrot.lane.b32.xlu0 %v140, 97
  %v197 = vpop.permute.xlu0 %196
  %vm207 = vcmask 588800
  %v209 = vsel %vm207, %v61, 0
  %v212 = vsel %vm207, %v62, 0
  %v215 = vsel %vm207, %v63, 0
  %v218 = vsel %vm207, %v64, 0
  %v221 = vsel %vm207, %v65, 0
  %v224 = vsel %vm207, %v66, 0
  %226 = vmatprep.subr.mxu0 0.0
  %227 = vmatpush1.msra.mxu0 0.0
  %228 = vmatprep.subr.mxu0 0.0
  %229 = vmatpush1.msra.mxu0 0.0
  %230 = vmatprep.subr.mxu0 0.0
  %231 = vmatpush1.msra.mxu0 0.0
  %232 = vmatprep.subr.mxu0 0.0
  %233 = vmatpush1.msra.mxu0 0.0
  %234 = vmatprep.subr.mxu0 0.0
  %235 = vmatpush1.msra.mxu0 0.0
  %236 = vmatprep.subr.mxu0 0.0
  %237 = vmatpush1.msra.mxu0 0.0
  %238 = vmatprep.subr.mxu0 0.0
  %239 = vmatpush1.msra.mxu0 0.0
  %240 = vmatprep.subr.mxu0 0.0
  %241 = vmatpush1.msra.mxu0 %v197
  %242 = vmatprep.subr.mxu0 0.0
  %243 = vmatpush1.msra.mxu0 %v195
  %244 = vmatprep.subr.mxu0 0.0
  %245 = vmatpush1.msra.mxu0 %v193
  %246 = vmatprep.subr.mxu0 0.0
  %247 = vmatpush1.msra.mxu0 %v191
  %248 = vmatprep.subr.mxu0 0.0
  %249 = vmatpush1.msra.mxu0 %v189
  %250 = vmatprep.subr.mxu0 0.0
  %251 = vmatpush1.msra.mxu0 %v187
  %252 = vmatprep.subr.mxu0 0.0
  %253 = vmatpush1.msra.mxu0 %v185
  %254 = vmatprep.subr.mxu0 0.0
  %255 = vmatpush1.msra.mxu0 %v183
  %256 = vmatprep.subr.mxu0 0.0
  %257 = vmatpush1.msra.mxu0 %v181
  %258 = vmatprep.subr.mxu0 0.0
  %259 = vmatpush2.msra.mxu0 0.0
  %260 = vmatprep.subr.mxu0 0.0
  %261 = vmatpush2.msra.mxu0 0.0
  %262 = vmatprep.subr.mxu0 0.0
  %263 = vmatpush2.msra.mxu0 0.0
  %264 = vmatprep.subr.mxu0 0.0
  %265 = vmatpush2.msra.mxu0 0.0
  %266 = vmatprep.subr.mxu0 0.0
  %267 = vmatpush2.msra.mxu0 0.0
  %268 = vmatprep.subr.mxu0 0.0
  %269 = vmatpush2.msra.mxu0 0.0
  %270 = vmatprep.subr.mxu0 0.0
  %271 = vmatpush2.msra.mxu0 0.0
  %272 = vmatprep.subr.mxu0 0.0
  %273 = vmatpush2.msra.mxu0 0.0
  %274 = vmatprep.subr.mxu0 0.0
  %275 = vmatpush2.msra.mxu0 0.0
  %276 = vmatprep.subr.mxu0 0.0
  %277 = vmatpush2.msra.mxu0 0.0
  %278 = vmatprep.subr.mxu0 0.0
  %279 = vmatpush2.msra.mxu0 0.0
  %280 = vmatprep.subr.mxu0 0.0
  %281 = vmatpush2.msra.mxu0 0.0
  %282 = vmatprep.subr.mxu0 0.0
  %283 = vmatpush2.msra.mxu0 0.0
  %284 = vmatprep.subr.mxu0 0.0
  %285 = vmatpush2.msra.mxu0 0.0
  %286 = vmatprep.subr.mxu0 0.0
  %287 = vmatpush2.msra.mxu0 0.0
  %288 = vmatprep.subr.mxu0 0.0
  %289 = vmatpush2.msra.mxu0 0.0
  %290 = vmatprep.mubr.f32.mxu0 0.0
  %291 = vmatmul.mubr.f32.gmra.mxu0 %v209
  %v292 = vpop.f32.mrf.mxu0
  %v293 = vadd.f32 %v150, %v292
  %v294 = vpop.f32.mrf.mxu0
  %295 = vmatprep.mubr.f32.mxu0 0.0
  %296 = vmatmul.mubr.f32.gmra.mxu0 %v212
  %v297 = vpop.f32.mrf.mxu0
  %v298 = vadd.f32 %v155, %v297
  %v299 = vpop.f32.mrf.mxu0
  %300 = vmatprep.mubr.f32.mxu0 0.0
  %301 = vmatmul.mubr.f32.gmra.mxu0 %v215
  %v302 = vpop.f32.mrf.mxu0
  %v303 = vadd.f32 %v160, %v302
  %v304 = vpop.f32.mrf.mxu0
  %305 = vmatprep.mubr.f32.mxu0 0.0
  %306 = vmatmul.mubr.f32.gmra.mxu0 %v218
  %v307 = vpop.f32.mrf.mxu0
  %v308 = vadd.f32 %v165, %v307
  %v309 = vpop.f32.mrf.mxu0
  %310 = vmatprep.mubr.f32.mxu0 0.0
  %311 = vmatmul.mubr.f32.gmra.mxu0 %v221
  %v312 = vpop.f32.mrf.mxu0
  %v313 = vadd.f32 %v170, %v312
  %v314 = vpop.f32.mrf.mxu0
  %315 = vmatprep.mubr.f32.mxu0 0.0
  %316 = vmatmul.mubr.f32.gmra.mxu0 %v224
  %v317 = vpop.f32.mrf.mxu0
  %v318 = vadd.f32 %v175, %v317
  %v319 = vpop.f32.mrf.mxu0
  %320 = vdwg.mxu0
  %v321 = vmax.f32 %v293, 0.0
  %v322 = vmax.f32 %v298, 0.0
  %v323 = vmax.f32 %v303, 0.0
  %v324 = vmax.f32 %v308, 0.0
  %v325 = vmax.f32 %v313, 0.0
  %v326 = vmax.f32 %v318, 0.0
  %s327 = scalar_lea.vmem %s1, 96
  %v328 = vld [vmem:[%s327] sm:$0xff]
  %v329 = vld [vmem:[%s327 + $0x8] sm:$0xff]
  %v330 = vld [vmem:[%s327 + $0x10] sm:$0xff]
  %v331 = vld [vmem:[%s327 + $0x18] sm:$0xff]
  %v332 = vld [vmem:[%s327 + $0x20] sm:$0xff]
  %v333 = vld [vmem:[%s327 + $0x28] sm:$0xff]
  %334 = vrot.lane.b32.xlu0 %v321, 32
  %v335 = vpop.permute.xlu0 %334
  %v336 = vsel %vm67, %v335, %v321
  %337 = vrot.lane.b32.xlu0 %v322, 32
  %v338 = vpop.permute.xlu0 %337
  %v339 = vsel %vm67, %v338, %v322
  %340 = vrot.lane.b32.xlu0 %v323, 32
  %v341 = vpop.permute.xlu0 %340
  %v342 = vsel %vm67, %v341, %v323
  %343 = vrot.lane.b32.xlu0 %v324, 32
  %v344 = vpop.permute.xlu0 %343
  %v345 = vsel %vm67, %v344, %v324
  %346 = vrot.lane.b32.xlu0 %v325, 32
  %v347 = vpop.permute.xlu0 %346
  %v348 = vsel %vm67, %v347, %v325
  %349 = vrot.lane.b32.xlu0 %v326, 32
  %v350 = vpop.permute.xlu0 %349
  %v351 = vsel %vm67, %v350, %v326
  %352 = vrot.lane.b32.xlu0 %v336, 32
  %v353 = vpop.permute.xlu0 %352
  %354 = vrot.lane.b32.xlu0 %v339, 32
  %v355 = vpop.permute.xlu0 %354
  %356 = vrot.lane.b32.xlu0 %v342, 32
  %v357 = vpop.permute.xlu0 %356
  %358 = vrot.lane.b32.xlu0 %v345, 32
  %v359 = vpop.permute.xlu0 %358
  %360 = vrot.lane.b32.xlu0 %v348, 32
  %v361 = vpop.permute.xlu0 %360
  %362 = vrot.lane.b32.xlu0 %v351, 32
  %v363 = vpop.permute.xlu0 %362
  %v364 = vsel %vm67, %v353, %v321
  %v365 = vsel %vm67, %v355, %v322
  %v366 = vsel %vm67, %v357, %v323
  %v367 = vsel %vm67, %v359, %v324
  %v368 = vsel %vm67, %v361, %v325
  %v369 = vsel %vm67, %v363, %v326
  %v370 = vld [vmem:[%s4] sm:$0xff]
  %v371 = vld [vmem:[%s4 + $0x8] sm:$0xff]
  %v372 = vld [vmem:[%s4 + $0x10] sm:$0xff]
  %v373 = vld [vmem:[%s4 + $0x18] sm:$0xff]
  %v374 = vld [vmem:[%s4 + $0x20] sm:$0xff]
  %v375 = vld [vmem:[%s4 + $0x28] sm:$0xff]
  %382 = vrot.lane.b32.xlu0 %v370, 31
  %v383 = vpop.permute.xlu0 %382
  %384 = vrot.lane.b32.xlu0 %v371, 31
  %v385 = vpop.permute.xlu0 %384
  %386 = vrot.lane.b32.xlu0 %v372, 31
  %v387 = vpop.permute.xlu0 %386
  %388 = vrot.lane.b32.xlu0 %v373, 31
  %v389 = vpop.permute.xlu0 %388
  %390 = vrot.lane.b32.xlu0 %v374, 31
  %v391 = vpop.permute.xlu0 %390
  %392 = vrot.lane.b32.xlu0 %v375, 31
  %v393 = vpop.permute.xlu0 %392
  %v400 = vmul.f32 %v364, %v383
  %v401 = vmul.f32 %v365, %v385
  %v402 = vmul.f32 %v366, %v387
  %v403 = vmul.f32 %v367, %v389
  %v404 = vmul.f32 %v368, %v391
  %v405 = vmul.f32 %v369, %v393
  %v406 = vld [vmem:[%s104] sm:$0xff]
  %v407 = vld [vmem:[%s104 + $0x8] sm:$0xff]
  %v408 = vld [vmem:[%s104 + $0x10] sm:$0xff]
  %v409 = vld [vmem:[%s104 + $0x18] sm:$0xff]
  %v410 = vld [vmem:[%s104 + $0x20] sm:$0xff]
  %v411 = vld [vmem:[%s104 + $0x28] sm:$0xff]
  %418 = vrot.lane.b32.xlu0 %v406, 1
  %v419 = vpop.permute.xlu0 %418
  %420 = vrot.lane.b32.xlu0 %v407, 1
  %v421 = vpop.permute.xlu0 %420
  %422 = vrot.lane.b32.xlu0 %v408, 1
  %v423 = vpop.permute.xlu0 %422
  %424 = vrot.lane.b32.xlu0 %v409, 1
  %v425 = vpop.permute.xlu0 %424
  %426 = vrot.lane.b32.xlu0 %v410, 1
  %v427 = vpop.permute.xlu0 %426
  %428 = vrot.lane.b32.xlu0 %v411, 1
  %v429 = vpop.permute.xlu0 %428
  %v436 = vmul.f32 %v364, %v419
  %v437 = vmul.f32 %v365, %v421
  %v438 = vmul.f32 %v366, %v423
  %v439 = vmul.f32 %v367, %v425
  %v440 = vmul.f32 %v368, %v427
  %v441 = vmul.f32 %v369, %v429
  %448 = vrot.lane.b32.xlu0 %v321, 31
  %v449 = vpop.permute.xlu0 %448
  %450 = vrot.lane.b32.xlu0 %v322, 31
  %v451 = vpop.permute.xlu0 %450
  %452 = vrot.lane.b32.xlu0 %v323, 31
  %v453 = vpop.permute.xlu0 %452
  %454 = vrot.lane.b32.xlu0 %v324, 31
  %v455 = vpop.permute.xlu0 %454
  %456 = vrot.lane.b32.xlu0 %v325, 31
  %v457 = vpop.permute.xlu0 %456
  %458 = vrot.lane.b32.xlu0 %v326, 31
  %v459 = vpop.permute.xlu0 %458
  %466 = vrot.lane.b32.xlu0 %v436, 30
  %v467 = vpop.permute.xlu0 %466
  %468 = vrot.lane.b32.xlu0 %v437, 30
  %v469 = vpop.permute.xlu0 %468
  %470 = vrot.lane.b32.xlu0 %v438, 30
  %v471 = vpop.permute.xlu0 %470
  %472 = vrot.lane.b32.xlu0 %v439, 30
  %v473 = vpop.permute.xlu0 %472
  %474 = vrot.lane.b32.xlu0 %v440, 30
  %v475 = vpop.permute.xlu0 %474
  %476 = vrot.lane.b32.xlu0 %v441, 30
  %v477 = vpop.permute.xlu0 %476
  %s478 = scalar_lea.vmem %s2, 48
  %v479 = vld [vmem:[%s478] sm:$0xff]
  %v480 = vld [vmem:[%s478 + $0x8] sm:$0xff]
  %v481 = vld [vmem:[%s478 + $0x10] sm:$0xff]
  %483 = vset.pattern.permute.xlu0 0
  %484 = vperm.xlu0 %483, %v479
  %v485 = vpop.permute.xlu0 %484
  %488 = vset.pattern.permute.xlu0 0
  %489 = vperm.xlu0 %488, %v480
  %v490 = vpop.permute.xlu0 %489
  %493 = vset.pattern.permute.xlu0 0
  %494 = vperm.xlu0 %493, %v481
  %v495 = vpop.permute.xlu0 %494
  %503 = vrot.lane.b32.xlu0 %v400, 97
  %v504 = vpop.permute.xlu0 %503
  %505 = vrot.lane.b32.xlu0 %v401, 97
  %v506 = vpop.permute.xlu0 %505
  %507 = vrot.lane.b32.xlu0 %v402, 97
  %v508 = vpop.permute.xlu0 %507
  %509 = vrot.lane.b32.xlu0 %v403, 97
  %v510 = vpop.permute.xlu0 %509
  %511 = vrot.lane.b32.xlu0 %v404, 97
  %v512 = vpop.permute.xlu0 %511
  %513 = vrot.lane.b32.xlu0 %v405, 97
  %v514 = vpop.permute.xlu0 %513
  %515 = vrot.lane.b32.xlu0 %v449, 97
  %v516 = vpop.permute.xlu0 %515
  %517 = vrot.lane.b32.xlu0 %v451, 97
  %v518 = vpop.permute.xlu0 %517
  %519 = vrot.lane.b32.xlu0 %v453, 97
  %v520 = vpop.permute.xlu0 %519
  %521 = vrot.lane.b32.xlu0 %v455, 97
  %v522 = vpop.permute.xlu0 %521
  %523 = vrot.lane.b32.xlu0 %v457, 97
  %v524 = vpop.permute.xlu0 %523
  %525 = vrot.lane.b32.xlu0 %v459, 97
  %v526 = vpop.permute.xlu0 %525
  %527 = vrot.lane.b32.xlu0 %v467, 97
  %v528 = vpop.permute.xlu0 %527
  %529 = vrot.lane.b32.xlu0 %v469, 97
  %v530 = vpop.permute.xlu0 %529
  %531 = vrot.lane.b32.xlu0 %v471, 97
  %v532 = vpop.permute.xlu0 %531
  %533 = vrot.lane.b32.xlu0 %v473, 97
  %v534 = vpop.permute.xlu0 %533
  %535 = vrot.lane.b32.xlu0 %v475, 97
  %v536 = vpop.permute.xlu0 %535
  %537 = vrot.lane.b32.xlu0 %v477, 97
  %v538 = vpop.permute.xlu0 %537
  %vm557 = vcmask 130048
  %v559 = vsel %vm557, %v329, 0
  %v562 = vsel %vm557, %v331, 0
  %v565 = vsel %vm557, %v333, 0
  %567 = vmatprep.subr.mxu0 0.0
  %568 = vmatpush1.msra.mxu0 %v534
  %569 = vmatprep.subr.mxu0 0.0
  %570 = vmatpush1.msra.mxu0 %v532
  %571 = vmatprep.subr.mxu0 0.0
  %572 = vmatpush1.msra.mxu0 %v530
  %573 = vmatprep.subr.mxu0 0.0
  %574 = vmatpush1.msra.mxu0 %v528
  %575 = vmatprep.subr.mxu0 0.0
  %576 = vmatpush1.msra.mxu0 %v526
  %577 = vmatprep.subr.mxu0 0.0
  %578 = vmatpush1.msra.mxu0 %v524
  %579 = vmatprep.subr.mxu0 0.0
  %580 = vmatpush1.msra.mxu0 %v522
  %581 = vmatprep.subr.mxu0 0.0
  %582 = vmatpush1.msra.mxu0 %v520
  %583 = vmatprep.subr.mxu0 0.0
  %584 = vmatpush1.msra.mxu0 %v518
  %585 = vmatprep.subr.mxu0 0.0
  %586 = vmatpush1.msra.mxu0 %v516
  %587 = vmatprep.subr.mxu0 0.0
  %588 = vmatpush1.msra.mxu0 %v514
  %589 = vmatprep.subr.mxu0 0.0
  %590 = vmatpush1.msra.mxu0 %v512
  %591 = vmatprep.subr.mxu0 0.0
  %592 = vmatpush1.msra.mxu0 %v510
  %593 = vmatprep.subr.mxu0 0.0
  %594 = vmatpush1.msra.mxu0 %v508
  %595 = vmatprep.subr.mxu0 0.0
  %596 = vmatpush1.msra.mxu0 %v506
  %597 = vmatprep.subr.mxu0 0.0
  %598 = vmatpush1.msra.mxu0 %v504
  %599 = vmatprep.subr.mxu0 0.0
  %600 = vmatpush2.msra.mxu0 0.0
  %601 = vmatprep.subr.mxu0 0.0
  %602 = vmatpush2.msra.mxu0 0.0
  %603 = vmatprep.subr.mxu0 0.0
  %604 = vmatpush2.msra.mxu0 0.0
  %605 = vmatprep.subr.mxu0 0.0
  %606 = vmatpush2.msra.mxu0 0.0
  %607 = vmatprep.subr.mxu0 0.0
  %608 = vmatpush2.msra.mxu0 0.0
  %609 = vmatprep.subr.mxu0 0.0
  %610 = vmatpush2.msra.mxu0 0.0
  %611 = vmatprep.subr.mxu0 0.0
  %612 = vmatpush2.msra.mxu0 0.0
  %613 = vmatprep.subr.mxu0 0.0
  %614 = vmatpush2.msra.mxu0 0.0
  %615 = vmatprep.subr.mxu0 0.0
  %616 = vmatpush2.msra.mxu0 0.0
  %617 = vmatprep.subr.mxu0 0.0
  %618 = vmatpush2.msra.mxu0 0.0
  %619 = vmatprep.subr.mxu0 0.0
  %620 = vmatpush2.msra.mxu0 0.0
  %621 = vmatprep.subr.mxu0 0.0
  %622 = vmatpush2.msra.mxu0 0.0
  %623 = vmatprep.subr.mxu0 0.0
  %624 = vmatpush2.msra.mxu0 0.0
  %625 = vmatprep.subr.mxu0 0.0
  %626 = vmatpush2.msra.mxu0 0.0
  %627 = vmatprep.subr.mxu0 0.0
  %628 = vmatpush2.msra.mxu0 %v538
  %629 = vmatprep.subr.mxu0 0.0
  %630 = vmatpush2.msra.mxu0 %v536
  %631 = vmatprep.mubr.f32.mxu0 %v559
  %632 = vmatmul.mubr.f32.gmra.mxu0 %v328
  %v633 = vpop.f32.mrf.mxu0
  %v634 = vadd.f32 %v485, %v633
  %v635 = vpop.f32.mrf.mxu0
  %636 = vmatprep.mubr.f32.mxu0 %v562
  %637 = vmatmul.mubr.f32.gmra.mxu0 %v330
  %v638 = vpop.f32.mrf.mxu0
  %v639 = vadd.f32 %v490, %v638
  %v640 = vpop.f32.mrf.mxu0
  %641 = vmatprep.mubr.f32.mxu0 %v565
  %642 = vmatmul.mubr.f32.gmra.mxu0 %v332
  %v643 = vpop.f32.mrf.mxu0
  %v644 = vadd.f32 %v495, %v643
  %v645 = vpop.f32.mrf.mxu0
  %646 = vdwg.mxu0
  %v647 = vand.u32 2147483647, %v639
  %vm648 = vcmp.le.f32.partialorder %v647, 0.7853982
  %vm649 = vcmp.lt.s32.totalorder %v639, 0
  %v650 = vand.u32 %v639, 2139095040
  %v651 = vshrl.u32 %v650, 23
  %v652 = vsub.s32 %v651, 127
  %v653 = vand.u32 2147483647, %v639
  %v654 = vand.u32 %v653, 8388607
  %v655 = vor.u32 %v654, 8388608
  %v656 = vsub.s32 0, %v655
  %v657 = vadd.s32 %v652, 1
  %vm658 = vcmp.gt.s32.totalorder %v657, 0
  %v659 = vsel %vm658, %v657, 0
  %v660 = vshrl.u32 %v659, 5
  %v661 = vand.u32 %v659, 31
  %v662 = vsub.s32 32, %v661
  %v663 = vshrl.u32 683565275, %v662
  %v664 = vshll.u32 683565275, %v661
  %v665 = vshrl.u32 2475754826, %v662
  %v666 = vor.u32 %v664, %v665
  %v667 = vshll.u32 2475754826, %v661
  %v668 = vshrl.u32 2131351028, %v662
  %v669 = vor.u32 %v667, %v668
  %v670 = vshll.u32 2131351028, %v661
  %v671 = vshrl.u32 2102212464, %v662
  %v672 = vor.u32 %v670, %v671
  %v673 = vshll.u32 2102212464, %v661
  %v674 = vshrl.u32 920167782, %v662
  %v675 = vor.u32 %v673, %v674
  %v676 = vshll.u32 920167782, %v661
  %v677 = vshrl.u32 1326507024, %v662
  %v678 = vor.u32 %v676, %v677
  %vm679 = vcmp.lt.s32.totalorder %v660, 1
  %vm680 = vcmp.lt.s32.totalorder %v660, 2
  %vm681 = vcmp.lt.s32.totalorder %v660, 3
  %vm682 = vcmp.lt.s32.totalorder %v660, 4
  %v683 = vsel %vm679, %v663, %v666
  %v684 = vsel %vm682, %v672, 2102212464
  %v685 = vsel %vm681, %v669, %v684
  %v686 = vsel %vm680, %v683, %v685
  %v687 = vsel %vm679, %v666, %v669
  %v688 = vsel %vm682, %v675, 920167782
  %v689 = vsel %vm681, %v672, %v688
  %v690 = vsel %vm680, %v687, %v689
  %v691 = vsel %vm679, %v669, %v672
  %v692 = vsel %vm682, %v678, 1326507024
  %v693 = vsel %vm681, %v675, %v692
  %v694 = vsel %vm680, %v691, %v693
  %v695 = vshll.u32 %v655, 8
  %v696 = vmul.u32.u64.compose %v695, %v694
  %v697 = vextract.low.u32 %v696
  %v698 = vextract.high.u32 %v696
  %v699 = vmul.u32.u64.compose %v695, %v690
  %v700 = vextract.low.u32 %v699
  %v701 = vextract.high.u32 %v699
  %v702 = vmul.u32 %v695, %v686
  %v703 = vadd.s32 %v698, %v700
  %vm704 = vc.u32 %v698, %v700
  %v705 = vadd.s32 %v701, 1
  %v706 = vsel %vm704, %v705, %v701
  %v707 = vadd.s32 %v702, %v706
  %v708 = vadd.s32 %v707, 536870912
  %v709 = vshrl.u32 %v708, 30
  %v710 = vshll.u32 %v709, 30
  %v711 = vsub.s32 %v707, %v710
  %vm712 = vcmp.lt.s32.totalorder %v711, 0
  %v713 = vsub.s32 0, %v711
  %v714 = vsel %vm712, %v713, %v711
  %v715 = vclz %v714
  %v716 = vsub.s32 %v715, 2
  %vm717 = vcmp.gt.s32.totalorder 0, %v716
  %v718 = vsel %vm717, 0, %v716
  %v719 = vsub.s32 32, %v718
  %v720 = vshll.u32 %v711, %v718
  %v721 = vshrl.u32 %v703, %v719
  %v722 = vor.u32 %v720, %v721
  %v723 = vsub.s32 4294967266, %v718
  %v724 = vadd.s32 %v723, 127
  %v725 = vshll.u32 %v724, 23
  %v726 = vor.u32 4788187, %v725
  %v727 = vand.u32 2147483647, %v726
  %v729 = vcvt.s32.f32 %v722
  %v730 = vmul.f32 %v729, %v727
  %v731 = vxor.u32 %v730, 2147483648
  %v732 = vsel %vm649, %v731, %v730
  %v733 = vsub.s32 4, %v709
  %v734 = vsel %vm649, %v733, %v709
  %v735 = vsel %vm648, %v639, %v732
  %v736 = vsel %vm648, 0, %v734
  %v737 = vcosq.f32.pop %v735
  %v738 = vsinq.f32.pop %v735
  %vm739 = vweird.f32 %v639
  %v740 = vand.u32 %v736, 3
  %vm741 = vcmp.lt.s32.totalorder %v740, 2
  %vm742 = vcmp.eq.s32.totalorder %v740, 0
  %v743 = vxor.u32 %v738, 2147483648
  %v744 = vsel %vm742, %v737, %v743
  %vm745 = vcmp.eq.s32.totalorder %v740, 2
  %v746 = vxor.u32 %v737, 2147483648
  %v747 = vsel %vm745, %v746, %v738
  %v748 = vsel %vm741, %v744, %v747
  %v749 = vsel %vm739, nan, %v748
  %v750 = vmul.f32 %v644, %v749
  %v751 = vand.u32 2147483647, %v639
  %vm752 = vcmp.le.f32.partialorder %v751, 0.7853982
  %vm753 = vcmp.lt.s32.totalorder %v639, 0
  %v754 = vand.u32 %v639, 2139095040
  %v755 = vshrl.u32 %v754, 23
  %v756 = vsub.s32 %v755, 127
  %v757 = vand.u32 2147483647, %v639
  %v758 = vand.u32 %v757, 8388607
  %v759 = vor.u32 %v758, 8388608
  %v760 = vsub.s32 0, %v759
  %v761 = vadd.s32 %v756, 1
  %vm762 = vcmp.gt.s32.totalorder %v761, 0
  %v763 = vsel %vm762, %v761, 0
  %v764 = vshrl.u32 %v763, 5
  %v765 = vand.u32 %v763, 31
  %v766 = vsub.s32 32, %v765
  %v767 = vshrl.u32 683565275, %v766
  %v768 = vshll.u32 683565275, %v765
  %v769 = vshrl.u32 2475754826, %v766
  %v770 = vor.u32 %v768, %v769
  %v771 = vshll.u32 2475754826, %v765
  %v772 = vshrl.u32 2131351028, %v766
  %v773 = vor.u32 %v771, %v772
  %v774 = vshll.u32 2131351028, %v765
  %v775 = vshrl.u32 2102212464, %v766
  %v776 = vor.u32 %v774, %v775
  %v777 = vshll.u32 2102212464, %v765
  %v778 = vshrl.u32 920167782, %v766
  %v779 = vor.u32 %v777, %v778
  %v780 = vshll.u32 920167782, %v765
  %v781 = vshrl.u32 1326507024, %v766
  %v782 = vor.u32 %v780, %v781
  %vm783 = vcmp.lt.s32.totalorder %v764, 1
  %vm784 = vcmp.lt.s32.totalorder %v764, 2
  %vm785 = vcmp.lt.s32.totalorder %v764, 3
  %vm786 = vcmp.lt.s32.totalorder %v764, 4
  %v787 = vsel %vm783, %v767, %v770
  %v788 = vsel %vm786, %v776, 2102212464
  %v789 = vsel %vm785, %v773, %v788
  %v790 = vsel %vm784, %v787, %v789
  %v791 = vsel %vm783, %v770, %v773
  %v792 = vsel %vm786, %v779, 920167782
  %v793 = vsel %vm785, %v776, %v792
  %v794 = vsel %vm784, %v791, %v793
  %v795 = vsel %vm783, %v773, %v776
  %v796 = vsel %vm786, %v782, 1326507024
  %v797 = vsel %vm785, %v779, %v796
  %v798 = vsel %vm784, %v795, %v797
  %v799 = vshll.u32 %v759, 8
  %v800 = vmul.u32.u64.compose %v799, %v798
  %v801 = vextract.low.u32 %v800
  %v802 = vextract.high.u32 %v800
  %v803 = vmul.u32.u64.compose %v799, %v794
  %v804 = vextract.low.u32 %v803
  %v805 = vextract.high.u32 %v803
  %v806 = vmul.u32 %v799, %v790
  %v807 = vadd.s32 %v802, %v804
  %vm808 = vc.u32 %v802, %v804
  %v809 = vadd.s32 %v805, 1
  %v810 = vsel %vm808, %v809, %v805
  %v811 = vadd.s32 %v806, %v810
  %v812 = vadd.s32 %v811, 536870912
  %v813 = vshrl.u32 %v812, 30
  %v814 = vshll.u32 %v813, 30
  %v815 = vsub.s32 %v811, %v814
  %vm816 = vcmp.lt.s32.totalorder %v815, 0
  %v817 = vsub.s32 0, %v815
  %v818 = vsel %vm816, %v817, %v815
  %v819 = vclz %v818
  %v820 = vsub.s32 %v819, 2
  %vm821 = vcmp.gt.s32.totalorder 0, %v820
  %v822 = vsel %vm821, 0, %v820
  %v823 = vsub.s32 32, %v822
  %v824 = vshll.u32 %v815, %v822
  %v825 = vshrl.u32 %v807, %v823
  %v826 = vor.u32 %v824, %v825
  %v827 = vsub.s32 4294967266, %v822
  %v828 = vadd.s32 %v827, 127
  %v829 = vshll.u32 %v828, 23
  %v830 = vor.u32 4788187, %v829
  %v831 = vand.u32 2147483647, %v830
  %v833 = vcvt.s32.f32 %v826
  %v834 = vmul.f32 %v833, %v831
  %v835 = vxor.u32 %v834, 2147483648
  %v836 = vsel %vm753, %v835, %v834
  %v837 = vsub.s32 4, %v813
  %v838 = vsel %vm753, %v837, %v813
  %v839 = vsel %vm752, %v639, %v836
  %v840 = vsel %vm752, 0, %v838
  %v841 = vcosq.f32.pop %v839
  %v842 = vsinq.f32.pop %v839
  %vm843 = vweird.f32 %v639
  %v844 = vadd.s32 %v840, 3
  %v845 = vand.u32 %v844, 3
  %vm846 = vcmp.lt.s32.totalorder %v845, 2
  %vm847 = vcmp.eq.s32.totalorder %v845, 0
  %v848 = vxor.u32 %v842, 2147483648
  %v849 = vsel %vm847, %v841, %v848
  %vm850 = vcmp.eq.s32.totalorder %v845, 2
  %v851 = vxor.u32 %v841, 2147483648
  %v852 = vsel %vm850, %v851, %v842
  %v853 = vsel %vm846, %v849, %v852
  %v854 = vsel %vm843, nan, %v853
  %v855 = vmul.f32 %v644, %v854
  %v856 = vld [vmem:[%s3] sm:$0xff]
  %v857 = vld [vmem:[%s3 + $0x8] sm:$0xff]
  %v858 = vld [vmem:[%s3 + $0x10] sm:$0xff]
  %v859 = vld [vmem:[%s3 + $0x18] sm:$0xff]
  %s860 = scalar_lea.vmem %s3, 32
  %v861 = vld [vmem:[%s860] sm:$0xff]
  %v862 = vld [vmem:[%s860 + $0x8] sm:$0xff]
  %v863 = vld [vmem:[%s860 + $0x10] sm:$0xff]
  %v864 = vld [vmem:[%s860 + $0x18] sm:$0xff]
  %vm865 = vcmask 261120
  %v867 = vsel %vm865, %v750, 0
  %869 = vmatprep.subr.mxu0 0.0
  %870 = vmatpush1.msra.mxu0 0.0
  %871 = vmatprep.subr.mxu0 0.0
  %872 = vmatpush1.msra.mxu0 0.0
  %873 = vmatprep.subr.mxu0 0.0
  %874 = vmatpush1.msra.mxu0 0.0
  %875 = vmatprep.subr.mxu0 0.0
  %876 = vmatpush1.msra.mxu0 0.0
  %877 = vmatprep.subr.mxu0 0.0
  %878 = vmatpush1.msra.mxu0 0.0
  %879 = vmatprep.subr.mxu0 0.0
  %880 = vmatpush1.msra.mxu0 0.0
  %881 = vmatprep.subr.mxu0 0.0
  %882 = vmatpush1.msra.mxu0 0.0
  %883 = vmatprep.subr.mxu0 0.0
  %884 = vmatpush1.msra.mxu0 0.0
  %885 = vmatprep.subr.mxu0 0.0
  %886 = vmatpush1.msra.mxu0 0.0
  %887 = vmatprep.subr.mxu0 0.0
  %888 = vmatpush1.msra.mxu0 0.0
  %889 = vmatprep.subr.mxu0 0.0
  %890 = vmatpush1.msra.mxu0 0.0
  %891 = vmatprep.subr.mxu0 0.0
  %892 = vmatpush1.msra.mxu0 0.0
  %893 = vmatprep.subr.mxu0 0.0
  %894 = vmatpush1.msra.mxu0 %v859
  %895 = vmatprep.subr.mxu0 0.0
  %896 = vmatpush1.msra.mxu0 %v858
  %897 = vmatprep.subr.mxu0 0.0
  %898 = vmatpush1.msra.mxu0 %v857
  %899 = vmatprep.subr.mxu0 0.0
  %900 = vmatpush1.msra.mxu0 %v856
  %901 = vmatprep.subr.mxu0 0.0
  %902 = vmatpush2.msra.mxu0 0.0
  %903 = vmatprep.subr.mxu0 0.0
  %904 = vmatpush2.msra.mxu0 0.0
  %905 = vmatprep.subr.mxu0 0.0
  %906 = vmatpush2.msra.mxu0 0.0
  %907 = vmatprep.subr.mxu0 0.0
  %908 = vmatpush2.msra.mxu0 0.0
  %909 = vmatprep.subr.mxu0 0.0
  %910 = vmatpush2.msra.mxu0 0.0
  %911 = vmatprep.subr.mxu0 0.0
  %912 = vmatpush2.msra.mxu0 0.0
  %913 = vmatprep.subr.mxu0 0.0
  %914 = vmatpush2.msra.mxu0 0.0
  %915 = vmatprep.subr.mxu0 0.0
  %916 = vmatpush2.msra.mxu0 0.0
  %917 = vmatprep.subr.mxu0 0.0
  %918 = vmatpush2.msra.mxu0 0.0
  %919 = vmatprep.subr.mxu0 0.0
  %920 = vmatpush2.msra.mxu0 0.0
  %921 = vmatprep.subr.mxu0 0.0
  %922 = vmatpush2.msra.mxu0 0.0
  %923 = vmatprep.subr.mxu0 0.0
  %924 = vmatpush2.msra.mxu0 0.0
  %925 = vmatprep.subr.mxu0 0.0
  %926 = vmatpush2.msra.mxu0 0.0
  %927 = vmatprep.subr.mxu0 0.0
  %928 = vmatpush2.msra.mxu0 0.0
  %929 = vmatprep.subr.mxu0 0.0
  %930 = vmatpush2.msra.mxu0 0.0
  %931 = vmatprep.subr.mxu0 0.0
  %932 = vmatpush2.msra.mxu0 0.0
  %933 = vmatprep.mubr.f32.mxu0 0.0
  %934 = vmatmul.mubr.f32.gmra.mxu0 %v867
  %v935 = vpop.f32.mrf.mxu0
  %v936 = vadd.f32 0.0, %v935
  %v937 = vpop.f32.mrf.mxu0
  %938 = vdwg.mxu0
  %v940 = vsel %vm865, %v855, 0
  %942 = vmatprep.subr.mxu0 0.0
  %943 = vmatpush1.msra.mxu0 0.0
  %944 = vmatprep.subr.mxu0 0.0
  %945 = vmatpush1.msra.mxu0 0.0
  %946 = vmatprep.subr.mxu0 0.0
  %947 = vmatpush1.msra.mxu0 0.0
  %948 = vmatprep.subr.mxu0 0.0
  %949 = vmatpush1.msra.mxu0 0.0
  %950 = vmatprep.subr.mxu0 0.0
  %951 = vmatpush1.msra.mxu0 0.0
  %952 = vmatprep.subr.mxu0 0.0
  %953 = vmatpush1.msra.mxu0 0.0
  %954 = vmatprep.subr.mxu0 0.0
  %955 = vmatpush1.msra.mxu0 0.0
  %956 = vmatprep.subr.mxu0 0.0
  %957 = vmatpush1.msra.mxu0 0.0
  %958 = vmatprep.subr.mxu0 0.0
  %959 = vmatpush1.msra.mxu0 0.0
  %960 = vmatprep.subr.mxu0 0.0
  %961 = vmatpush1.msra.mxu0 0.0
  %962 = vmatprep.subr.mxu0 0.0
  %963 = vmatpush1.msra.mxu0 0.0
  %964 = vmatprep.subr.mxu0 0.0
  %965 = vmatpush1.msra.mxu0 0.0
  %966 = vmatprep.subr.mxu0 0.0
  %967 = vmatpush1.msra.mxu0 %v864
  %968 = vmatprep.subr.mxu0 0.0
  %969 = vmatpush1.msra.mxu0 %v863
  %970 = vmatprep.subr.mxu0 0.0
  %971 = vmatpush1.msra.mxu0 %v862
  %972 = vmatprep.subr.mxu0 0.0
  %973 = vmatpush1.msra.mxu0 %v861
  %974 = vmatprep.subr.mxu0 0.0
  %975 = vmatpush2.msra.mxu0 0.0
  %976 = vmatprep.subr.mxu0 0.0
  %977 = vmatpush2.msra.mxu0 0.0
  %978 = vmatprep.subr.mxu0 0.0
  %979 = vmatpush2.msra.mxu0 0.0
  %980 = vmatprep.subr.mxu0 0.0
  %981 = vmatpush2.msra.mxu0 0.0
  %982 = vmatprep.subr.mxu0 0.0
  %983 = vmatpush2.msra.mxu0 0.0
  %984 = vmatprep.subr.mxu0 0.0
  %985 = vmatpush2.msra.mxu0 0.0
  %986 = vmatprep.subr.mxu0 0.0
  %987 = vmatpush2.msra.mxu0 0.0
  %988 = vmatprep.subr.mxu0 0.0
  %989 = vmatpush2.msra.mxu0 0.0
  %990 = vmatprep.subr.mxu0 0.0
  %991 = vmatpush2.msra.mxu0 0.0
  %992 = vmatprep.subr.mxu0 0.0
  %993 = vmatpush2.msra.mxu0 0.0
  %994 = vmatprep.subr.mxu0 0.0
  %995 = vmatpush2.msra.mxu0 0.0
  %996 = vmatprep.subr.mxu0 0.0
  %997 = vmatpush2.msra.mxu0 0.0
  %998 = vmatprep.subr.mxu0 0.0
  %999 = vmatpush2.msra.mxu0 0.0
  %1000 = vmatprep.subr.mxu0 0.0
  %1001 = vmatpush2.msra.mxu0 0.0
  %1002 = vmatprep.subr.mxu0 0.0
  %1003 = vmatpush2.msra.mxu0 0.0
  %1004 = vmatprep.subr.mxu0 0.0
  %1005 = vmatpush2.msra.mxu0 0.0
  %1006 = vmatprep.mubr.f32.mxu0 0.0
  %1007 = vmatmul.mubr.f32.gmra.mxu0 %v940
  %v1008 = vpop.f32.mrf.mxu0
  %v1009 = vadd.f32 0.0, %v1008
  %v1010 = vpop.f32.mrf.mxu0
  %1011 = vdwg.mxu0
  %v1012 = vsub.f32 %v936, %v1009
  %1013 = vmatprep.subr.mxu0 0.0
  %1014 = vmatpush1.msra.mxu0 0.0
  %1015 = vmatprep.subr.mxu0 0.0
  %1016 = vmatpush1.msra.mxu0 0.0
  %1017 = vmatprep.subr.mxu0 0.0
  %1018 = vmatpush1.msra.mxu0 0.0
  %1019 = vmatprep.subr.mxu0 0.0
  %1020 = vmatpush1.msra.mxu0 0.0
  %1021 = vmatprep.subr.mxu0 0.0
  %1022 = vmatpush1.msra.mxu0 0.0
  %1023 = vmatprep.subr.mxu0 0.0
  %1024 = vmatpush1.msra.mxu0 0.0
  %1025 = vmatprep.subr.mxu0 0.0
  %1026 = vmatpush1.msra.mxu0 0.0
  %1027 = vmatprep.subr.mxu0 0.0
  %1028 = vmatpush1.msra.mxu0 0.0
  %1029 = vmatprep.subr.mxu0 0.0
  %1030 = vmatpush1.msra.mxu0 0.0
  %1031 = vmatprep.subr.mxu0 0.0
  %1032 = vmatpush1.msra.mxu0 0.0
  %1033 = vmatprep.subr.mxu0 0.0
  %1034 = vmatpush1.msra.mxu0 0.0
  %1035 = vmatprep.subr.mxu0 0.0
  %1036 = vmatpush1.msra.mxu0 0.0
  %1037 = vmatprep.subr.mxu0 0.0
  %1038 = vmatpush1.msra.mxu0 %v859
  %1039 = vmatprep.subr.mxu0 0.0
  %1040 = vmatpush1.msra.mxu0 %v858
  %1041 = vmatprep.subr.mxu0 0.0
  %1042 = vmatpush1.msra.mxu0 %v857
  %1043 = vmatprep.subr.mxu0 0.0
  %1044 = vmatpush1.msra.mxu0 %v856
  %1045 = vmatprep.subr.mxu0 0.0
  %1046 = vmatpush2.msra.mxu0 0.0
  %1047 = vmatprep.subr.mxu0 0.0
  %1048 = vmatpush2.msra.mxu0 0.0
  %1049 = vmatprep.subr.mxu0 0.0
  %1050 = vmatpush2.msra.mxu0 0.0
  %1051 = vmatprep.subr.mxu0 0.0
  %1052 = vmatpush2.msra.mxu0 0.0
  %1053 = vmatprep.subr.mxu0 0.0
  %1054 = vmatpush2.msra.mxu0 0.0
  %1055 = vmatprep.subr.mxu0 0.0
  %1056 = vmatpush2.msra.mxu0 0.0
  %1057 = vmatprep.subr.mxu0 0.0
  %1058 = vmatpush2.msra.mxu0 0.0
  %1059 = vmatprep.subr.mxu0 0.0
  %1060 = vmatpush2.msra.mxu0 0.0
  %1061 = vmatprep.subr.mxu0 0.0
  %1062 = vmatpush2.msra.mxu0 0.0
  %1063 = vmatprep.subr.mxu0 0.0
  %1064 = vmatpush2.msra.mxu0 0.0
  %1065 = vmatprep.subr.mxu0 0.0
  %1066 = vmatpush2.msra.mxu0 0.0
  %1067 = vmatprep.subr.mxu0 0.0
  %1068 = vmatpush2.msra.mxu0 0.0
  %1069 = vmatprep.subr.mxu0 0.0
  %1070 = vmatpush2.msra.mxu0 0.0
  %1071 = vmatprep.subr.mxu0 0.0
  %1072 = vmatpush2.msra.mxu0 0.0
  %1073 = vmatprep.subr.mxu0 0.0
  %1074 = vmatpush2.msra.mxu0 0.0
  %1075 = vmatprep.subr.mxu0 0.0
  %1076 = vmatpush2.msra.mxu0 0.0
  %1077 = vmatprep.mubr.f32.mxu0 0.0
  %1078 = vmatmul.mubr.f32.gmra.mxu0 %v940
  %v1079 = vpop.f32.mrf.mxu0
  %v1080 = vadd.f32 0.0, %v1079
  %v1081 = vpop.f32.mrf.mxu0
  %1082 = vdwg.mxu0
  %1083 = vmatprep.subr.mxu0 0.0
  %1084 = vmatpush1.msra.mxu0 0.0
  %1085 = vmatprep.subr.mxu0 0.0
  %1086 = vmatpush1.msra.mxu0 0.0
  %1087 = vmatprep.subr.mxu0 0.0
  %1088 = vmatpush1.msra.mxu0 0.0
  %1089 = vmatprep.subr.mxu0 0.0
  %1090 = vmatpush1.msra.mxu0 0.0
  %1091 = vmatprep.subr.mxu0 0.0
  %1092 = vmatpush1.msra.mxu0 0.0
  %1093 = vmatprep.subr.mxu0 0.0
  %1094 = vmatpush1.msra.mxu0 0.0
  %1095 = vmatprep.subr.mxu0 0.0
  %1096 = vmatpush1.msra.mxu0 0.0
  %1097 = vmatprep.subr.mxu0 0.0
  %1098 = vmatpush1.msra.mxu0 0.0
  %1099 = vmatprep.subr.mxu0 0.0
  %1100 = vmatpush1.msra.mxu0 0.0
  %1101 = vmatprep.subr.mxu0 0.0
  %1102 = vmatpush1.msra.mxu0 0.0
  %1103 = vmatprep.subr.mxu0 0.0
  %1104 = vmatpush1.msra.mxu0 0.0
  %1105 = vmatprep.subr.mxu0 0.0
  %1106 = vmatpush1.msra.mxu0 0.0
  %1107 = vmatprep.subr.mxu0 0.0
  %1108 = vmatpush1.msra.mxu0 %v864
  %1109 = vmatprep.subr.mxu0 0.0
  %1110 = vmatpush1.msra.mxu0 %v863
  %1111 = vmatprep.subr.mxu0 0.0
  %1112 = vmatpush1.msra.mxu0 %v862
  %1113 = vmatprep.subr.mxu0 0.0
  %1114 = vmatpush1.msra.mxu0 %v861
  %1115 = vmatprep.subr.mxu0 0.0
  %1116 = vmatpush2.msra.mxu0 0.0
  %1117 = vmatprep.subr.mxu0 0.0
  %1118 = vmatpush2.msra.mxu0 0.0
  %1119 = vmatprep.subr.mxu0 0.0
  %1120 = vmatpush2.msra.mxu0 0.0
  %1121 = vmatprep.subr.mxu0 0.0
  %1122 = vmatpush2.msra.mxu0 0.0
  %1123 = vmatprep.subr.mxu0 0.0
  %1124 = vmatpush2.msra.mxu0 0.0
  %1125 = vmatprep.subr.mxu0 0.0
  %1126 = vmatpush2.msra.mxu0 0.0
  %1127 = vmatprep.subr.mxu0 0.0
  %1128 = vmatpush2.msra.mxu0 0.0
  %1129 = vmatprep.subr.mxu0 0.0
  %1130 = vmatpush2.msra.mxu0 0.0
  %1131 = vmatprep.subr.mxu0 0.0
  %1132 = vmatpush2.msra.mxu0 0.0
  %1133 = vmatprep.subr.mxu0 0.0
  %1134 = vmatpush2.msra.mxu0 0.0
  %1135 = vmatprep.subr.mxu0 0.0
  %1136 = vmatpush2.msra.mxu0 0.0
  %1137 = vmatprep.subr.mxu0 0.0
  %1138 = vmatpush2.msra.mxu0 0.0
  %1139 = vmatprep.subr.mxu0 0.0
  %1140 = vmatpush2.msra.mxu0 0.0
  %1141 = vmatprep.subr.mxu0 0.0
  %1142 = vmatpush2.msra.mxu0 0.0
  %1143 = vmatprep.subr.mxu0 0.0
  %1144 = vmatpush2.msra.mxu0 0.0
  %1145 = vmatprep.subr.mxu0 0.0
  %1146 = vmatpush2.msra.mxu0 0.0
  %1147 = vmatprep.mubr.f32.mxu0 0.0
  %1148 = vmatmul.mubr.f32.gmra.mxu0 %v867
  %v1149 = vpop.f32.mrf.mxu0
  %v1150 = vadd.f32 %v1080, %v1149
  %v1151 = vpop.f32.mrf.mxu0
  %1152 = vdwg.mxu0
  %v1153 = vmul.f32 %v1012, %v1012
  %v1154 = vmul.f32 %v1150, %v1150
  %v1155 = vadd.f32 %v1153, %v1154
  %v1156 = vrsqrt.pop %v1155
  %v1157 = vmul.f32 %v1155, %v1156
  %vm1158 = vcmp.eq.f32.partialorder %v1155, inf
  %v1159 = vsel %vm1158, %v1155, %v1157
  %vm1160 = vcmp.eq.f32.partialorder %v1155, 0.0
  %v1161 = vand.u32 %v1155, 2147483648
  %v1162 = vsel %vm1160, %v1161, %v1159
  %v1163 = vadd.f32 %v634, %v1162
  %v1164 = vadd.f32 %v1163, %v20
  %1165 = vst.msk [vmem:[%s5] sm:$0xff] %vm865, %v1164
  // Predicated region
  $region22: #{sff_block_pallas.1} parent=0 // pred_check
    _
  $region23: #{sff_block_pallas.1} parent=0 // pred_check_branch
    %1167 = sbr.rel (0) target = $region25
  $region24: #{sff_block_pallas.1} parent=0 // pred_region
    _
  $region25: #{sff_block_pallas.1} parent=0 // pred_fallthru
    _
  // Predicated region
  $region26: #{sff_block_pallas.1} parent=0 // pred_check
    _
  $region27: #{sff_block_pallas.1} parent=0 // pred_check_branch
    %1169 = sbr.rel (0) target = $region29
  $region28: #{sff_block_pallas.1} parent=0 // pred_region
    _
  $region29: #{sff_block_pallas.1} parent=0 // pred_fallthru
    _

</llo_original>
